<compile_context>
chip_gen: v6e
topology: v6e:2x2x1
jax: 0.10.0
libtpu: 0.0.40
codegen_flags: <defaults>
</compile_context>

<pallas_src>
import jax
import jax.numpy as jnp
from jax import lax
from jax.experimental import pallas as pl
from jax.experimental.pallas import tpu as pltpu

_BUF_BYTES = 8 << 20        # target bytes per input buffer (x2 for double-buffering)
_CHUNK = 512                # rows per strip-mined inner chunk (multiple of 8)
_PALLAS_MIN_ROWS = 1024     # below this, XLA fusion beats kernel-launch overhead
_VMEM_LIMIT = 32 << 20      # 2 x 8 MiB input buffers + small temporaries + slack


def _round_up(n: int, m: int) -> int:
    return ((n + m - 1) // m) * m


def _choose_row_tile(rows: int, L: int, itemsize: int) -> tuple[int, int]:
    """Returns (row_tile, num_tiles); row_tile % 8 == 0, byte-capped per buffer."""
    rows8 = _round_up(rows, 8)
    tr_cap = max(_CHUNK, (_BUF_BYTES // (L * itemsize)) // _CHUNK * _CHUNK)
    if rows8 <= 2 * _CHUNK:
        # small: 2 grid steps so the DMA stream still double-buffers
        tr = max(8, _round_up(pl.cdiv(rows8, 2), 8))
    else:
        # aim for an even tile count (>= 2) so v7x's two TCs split evenly
        nt = max(2, pl.cdiv(rows8, tr_cap))
        nt += nt % 2
        tr = min(tr_cap, _round_up(pl.cdiv(rows8, nt), 8))
    num_tiles = pl.cdiv(rows, tr)
    return tr, num_tiles


def _make_kernel(rows: int, tr: int, L: int, num_tiles: int):
    """Builds a kernel closed over static sizes (rows, tile rows, tile count)."""
    chunk = min(_CHUNK, tr)
    n_full = tr // chunk
    rem = tr - n_full * chunk
    rows_last = rows - (num_tiles - 1) * tr   # valid rows in the last tile

    def _chunk_sum(x_ref, start, csize, valid_rows, acc):
        xv = x_ref[pl.ds(start, csize), :]
        # next-element view along the lane axis: xn[:, j] == xv[:, (j+1) % L]
        xn = pltpu.roll(xv, shift=L - 1, axis=1)
        dec = (xn < xv).astype(jnp.float32)           # strict decreasing step
        if valid_rows is not None:
            # last-tile only: rows past the array end are garbage -> mask them
            row = lax.broadcasted_iota(jnp.int32, (csize, L), 0) + start
            dec = jnp.where(row < valid_rows, dec, 0.0)
        return acc + jnp.sum(dec, axis=0, keepdims=True)

    def _tile_sum(x_ref, valid_rows):
        acc = jnp.zeros((1, L), jnp.float32)
        if n_full == 1:
            acc = _chunk_sum(x_ref, 0, chunk, valid_rows, acc)
        elif n_full > 1:
            def body(c, a):
                start = pl.multiple_of(c * chunk, chunk)
                return _chunk_sum(x_ref, start, chunk, valid_rows, a)
            acc = lax.fori_loop(0, n_full, body, acc,
                                unroll=n_full if n_full <= 4 else 4)
        if rem:
            acc = _chunk_sum(x_ref, n_full * chunk, rem, valid_rows, acc)
        return acc

    def kernel(x_ref, o_ref):
        # x_ref: (tr, L) tile in native dtype.  o_ref: (1, 1, L) f32 partial.
        if rows_last == tr:
            # rows divides evenly: no masking anywhere
            o_ref[0] = _tile_sum(x_ref, None)
        else:
            i = pl.program_id(0)

            @pl.when(i < num_tiles - 1)
            def _():
                o_ref[0] = _tile_sum(x_ref, None)

            @pl.when(i == num_tiles - 1)
            def _():
                o_ref[0] = _tile_sum(x_ref, rows_last)

    return kernel


def monotonous_loss(x: jax.Array, *, force_pallas: bool = False) -> jax.Array:
    """x: (B, C, L); the PyTorch module uses C=3, L=256.  Returns scalar f32."""
    B, C, L = x.shape
    rows = B * C
    scale = 1.0 / (float(L - 1) * float(rows))

    if rows < _PALLAS_MIN_ROWS and not force_pallas:
        # launch + pipeline-prologue overhead dominates tiny problems
        return monotonous_loss_ref(x)

    x2 = x.reshape(rows, L)                # row-major collapse, no copy; native dtype
    itemsize = x2.dtype.itemsize
    tr, num_tiles = _choose_row_tile(rows, L, itemsize)
    kernel = _make_kernel(rows, tr, L, num_tiles)

    partials = pl.pallas_call(
        kernel,
        out_shape=jax.ShapeDtypeStruct((num_tiles, 1, L), jnp.float32),
        grid=(num_tiles,),
        in_specs=[pl.BlockSpec((tr, L), lambda i: (i, 0))],
        out_specs=pl.BlockSpec((1, 1, L), lambda i: (i, 0, 0)),
        compiler_params=pltpu.CompilerParams(
            dimension_semantics=("parallel",),      # per-tile outputs -> dual-TC
            vmem_limit_bytes=_VMEM_LIMIT),
        cost_estimate=pl.CostEstimate(
            flops=rows * L,
            transcendentals=0,
            bytes_accessed=rows * L * itemsize + num_tiles * L * 4),
    )(x2)

    # Exclude the wrapped lane (L-1) from the roll on the tiny partials, then
    # finish the sum + normalization in plain JAX.
    # TODO(synk): for rows > ~65k the total count can exceed 2**24 and the f32 sum
    # of partials starts to drift; switch to hierarchical / int accumulation there.
    return jnp.sum(partials[..., : L - 1]) * jnp.float32(scale)


def monotonous_loss_ref(x: jax.Array) -> jax.Array:
    """Pure-JAX reference of the PyTorch forward."""
    xf = x.astype(jnp.float32)
    d = xf[:, :, 1:] - xf[:, :, :-1]
    g_sum = jnp.sum(jnp.where(d < 0.0, 1.0, 0.0), axis=-1) / (x.shape[-1] - 1)
    return jnp.mean(g_sum)


if __name__ == "__main__":
    key = jax.random.PRNGKey(0)
    k0, k1, k2 = jax.random.split(key, 3)

    # The module hardcodes 3 channels and 255 difference steps -> input (B, 3, 256).
    B = 2
    x = jax.random.uniform(k0, (B, 3, 256), dtype=jnp.float32)

    # Tiny problem: force the Pallas path (single ragged 8-row tile, 6 valid rows).
    loss = jax.block_until_ready(monotonous_loss(x, force_pallas=True))
    ref = jax.block_until_ready(monotonous_loss_ref(x))
    assert jnp.allclose(loss, ref, atol=1e-5, rtol=1e-5), (loss, ref)

    # Auto-dispatch for tiny inputs (pure-JAX fallback).
    loss_small = jax.block_until_ready(monotonous_loss(x))
    assert jnp.allclose(loss_small, ref, atol=1e-5, rtol=1e-5), (loss_small, ref)

    # Ragged case: rows = 1050 -> 2 tiles of 528 rows, last tile masked (522 valid),
    # exercises the remainder chunk and the in-kernel last-tile row mask.
    B1 = 350
    x1 = jax.random.normal(k1, (B1, 3, 256), dtype=jnp.float32)
    loss1 = jax.block_until_ready(monotonous_loss(x1))
    ref1 = jax.block_until_ready(monotonous_loss_ref(x1))
    assert jnp.allclose(loss1, ref1, atol=1e-5, rtol=1e-5), (loss1, ref1)

    # Even case: rows = 1536 -> 2 tiles of 768 rows, no masking, balanced grid.
    B2 = 512
    x2 = jax.random.normal(k2, (B2, 3, 256), dtype=jnp.float32)
    loss2 = jax.block_until_ready(monotonous_loss(x2))
    ref2 = jax.block_until_ready(monotonous_loss_ref(x2))
    assert jnp.allclose(loss2, ref2, atol=1e-5, rtol=1e-5), (loss2, ref2)

    print("KERNEL_OK")
</pallas_src>

<mosaic_0001>
module attributes {stable_mosaic.version = 11 : i64} {
  func.func @kernel(%arg0: i32, %arg1: memref<8x256xf32, #tpu.memory_space<vmem>>, %arg2: memref<1x1x256xf32, #tpu.memory_space<vmem>>) attributes {dimension_semantics = [#tpu.dimension_semantics<parallel>], iteration_bounds = array<i64: 1>, scalar_prefetch = 0 : i64, scratch_operands = 0 : i64, tpu.core_type = #tpu.core_type<tc>, window_params = [{transform_indices = @transform_0, window_bounds = array<i64: 8, 256>}, {transform_indices = @transform_1, window_bounds = array<i64: 1, 1, 256>}]} {
    %c0_i32 = arith.constant 0 : i32
    %0 = arith.cmpi slt, %arg0, %c0_i32 : i32
    %1 = arith.extui %0 : i1 to i32
    %c0_i32_0 = arith.constant 0 : i32
    %2 = arith.cmpi ne, %1, %c0_i32_0 : i32
    scf.if %2 {
      %cst = arith.constant 0.000000e+00 : f32
      %6 = vector.broadcast %cst : f32 to vector<1x256xf32>
      %c0 = arith.constant 0 : index
      %c0_3 = arith.constant 0 : index
      %7 = vector.load %arg1[%c0, %c0_3] : memref<8x256xf32, #tpu.memory_space<vmem>>, vector<8x256xf32>
      %c255_i32 = arith.constant 255 : i32
      %8 = tpu.dynamic_rotate %7 by %c255_i32 dim 1 : vector<8x256xf32>, i32 -> vector<8x256xf32>
      %9 = arith.cmpf olt, %8, %7 : vector<8x256xf32>
      %10 = arith.extui %9 : vector<8x256xi1> to vector<8x256xi32>
      %11 = arith.sitofp %10 : vector<8x256xi32> to vector<8x256xf32>
      %cst_4 = arith.constant dense<0.000000e+00> : vector<256xf32>
      %12 = vector.multi_reduction <add>, %11, %cst_4 [0] : vector<8x256xf32> to vector<256xf32>
      %13 = vector.shape_cast %12 : vector<256xf32> to vector<1x256xf32>
      %14 = arith.addf %6, %13 : vector<1x256xf32>
      %c0_5 = arith.constant 0 : index
      %c0_6 = arith.constant 0 : index
      %c0_7 = arith.constant 0 : index
      %15 = vector.load %arg2[%c0_5, %c0_6, %c0_7] : memref<1x1x256xf32, #tpu.memory_space<vmem>>, vector<1x1x256xf32>
      %16 = vector.shape_cast %15 : vector<1x1x256xf32> to vector<1x256xf32>
      %17 = vector.shape_cast %14 : vector<1x256xf32> to vector<1x1x256xf32>
      tpu.vector_store %arg2[%c0_5, %c0_6, %c0_7], %17 {strides = array<i32>} : memref<1x1x256xf32, #tpu.memory_space<vmem>>, vector<1x1x256xf32>,
    } else {
    }
    %c0_i32_1 = arith.constant 0 : i32
    %3 = arith.cmpi eq, %arg0, %c0_i32_1 : i32
    %4 = arith.extui %3 : i1 to i32
    %c0_i32_2 = arith.constant 0 : i32
    %5 = arith.cmpi ne, %4, %c0_i32_2 : i32
    scf.if %5 {
      %cst = arith.constant 0.000000e+00 : f32
      %6 = vector.broadcast %cst : f32 to vector<1x256xf32>
      %c0 = arith.constant 0 : index
      %c0_3 = arith.constant 0 : index
      %7 = vector.load %arg1[%c0, %c0_3] : memref<8x256xf32, #tpu.memory_space<vmem>>, vector<8x256xf32>
      %c255_i32 = arith.constant 255 : i32
      %8 = tpu.dynamic_rotate %7 by %c255_i32 dim 1 : vector<8x256xf32>, i32 -> vector<8x256xf32>
      %9 = arith.cmpf olt, %8, %7 : vector<8x256xf32>
      %10 = arith.extui %9 : vector<8x256xi1> to vector<8x256xi32>
      %11 = arith.sitofp %10 : vector<8x256xi32> to vector<8x256xf32>
      %12 = tpu.iota {dimensions = array<i32: 0>} : vector<8x256xi32>
      %c0_i32_4 = arith.constant 0 : i32
      %13 = vector.broadcast %c0_i32_4 : i32 to vector<8x256xi32>
      %14 = arith.addi %12, %13 : vector<8x256xi32>
      %c6_i32 = arith.constant 6 : i32
      %15 = vector.broadcast %c6_i32 : i32 to vector<8x256xi32>
      %16 = arith.cmpi slt, %14, %15 : vector<8x256xi32>
      %cst_5 = arith.constant 0.000000e+00 : f32
      %17 = vector.broadcast %cst_5 : f32 to vector<8x256xf32>
      %18 = arith.select %16, %11, %17 : vector<8x256xi1>, vector<8x256xf32>
      %cst_6 = arith.constant dense<0.000000e+00> : vector<256xf32>
      %19 = vector.multi_reduction <add>, %18, %cst_6 [0] : vector<8x256xf32> to vector<256xf32>
      %20 = vector.shape_cast %19 : vector<256xf32> to vector<1x256xf32>
      %21 = arith.addf %6, %20 : vector<1x256xf32>
      %c0_7 = arith.constant 0 : index
      %c0_8 = arith.constant 0 : index
      %c0_9 = arith.constant 0 : index
      %22 = vector.load %arg2[%c0_7, %c0_8, %c0_9] : memref<1x1x256xf32, #tpu.memory_space<vmem>>, vector<1x1x256xf32>
      %23 = vector.shape_cast %22 : vector<1x1x256xf32> to vector<1x256xf32>
      %24 = vector.shape_cast %21 : vector<1x256xf32> to vector<1x1x256xf32>
      tpu.vector_store %arg2[%c0_7, %c0_8, %c0_9], %24 {strides = array<i32>} : memref<1x1x256xf32, #tpu.memory_space<vmem>>, vector<1x1x256xf32>,
    } else {
    }
    return
  }
  func.func @transform_0(%arg0: i32) -> (i32, i32) {
    %c0_i32 = arith.constant 0 : i32
    %c0_i32_0 = arith.constant 0 : i32
    return %arg0, %c0_i32 : i32, i32
  }
  func.func @transform_1(%arg0: i32) -> (i32, i32, i32) {
    %c0_i32 = arith.constant 0 : i32
    %c0_i32_0 = arith.constant 0 : i32
    %c0_i32_1 = arith.constant 0 : i32
    return %arg0, %c0_i32, %c0_i32_0 : i32, i32, i32
  }
}

</mosaic_0001>

<llo_original>
// kernel: tpu_custom_call.1
$region0: #{tpu_custom_call.1}
  #allocation0 [shape = 'u32[]', space=smem, size = 0x4, offset = 0x4, fixed_abs, tag = 'smem constant byte address 0x4 - core index']
  #allocation1 [shape = 'u32[144,128]{1,0:T(1,128)}', space=vmem, size = 0x12000, scoped, tag = 'internal scratch']
  %s0 = inlined_call_operand.hbm [shape: f32[6,256], index: 0, kind: input, shape index: {}]
  %s1 = inlined_call_operand.hbm [shape: f32[1,1,256], index: 1, kind: output, shape index: {}]
  %s2 = sld [smem:[#allocation0]]
  $region26: #{tpu_custom_call.1} parent=0
    _
  %s4 = ssub.s32 1, %s2
  %s5 = scalar_select 0, %s4, %s2
  $region1: #{tpu_custom_call.1} parent=0
    #allocation2 [shape = 'u8[8192]{0}', space=vmem, size = 0x2000, scoped, tag = 'input window, operand 0, single buffered']
    #allocation3 [shape = 's32[1]{0}', space=sflag, size = 0x4, scoped, tag = 'scoped memory for tpu_custom_call.1']
    #allocation4 [shape = 's32[1]{0}', space=sflag, size = 0x4, scoped, tag = 'scoped memory for tpu_custom_call.1']
    #allocation5 [shape = 'u8[1024]{0}', space=vmem, size = 0x400, scoped, tag = 'output window, operand 0, single buffered']
    %6 = vsyncpa [#allocation3], 0
    %7 = vsyncpa [#allocation4], 0
    // Predicated region
    $region2: #{tpu_custom_call.1} parent=1 // pred_check
      _
    $region3: #{tpu_custom_call.1} parent=1 // pred_check_branch
      %9 = sbr.rel (0) target = $region5
    $region4: #{tpu_custom_call.1} parent=1 // pred_region
      %s11 = ssub.s32 256, 256
      %12 = vsyncadd [#allocation3], %s11
      %s14 = sshll.u32 [#allocation2], 4
      %s15 = int_to_ptr.vmem [resolvable:$true] %s14
      %17 = dma.hbm_to_vmem [thread:$0]  %s0, 256, %s15, [#allocation3]
    $region5: #{tpu_custom_call.1} parent=1 // pred_fallthru
      _
    // Predicated region
    $region6: #{tpu_custom_call.1} parent=1 // pred_check
      _
    $region7: #{tpu_custom_call.1} parent=1 // pred_check_branch
      %19 = sbr.rel (0) target = $region9
    $region8: #{tpu_custom_call.1} parent=1 // pred_region
      %20 = dma.done [#allocation3], 256
    $region9: #{tpu_custom_call.1} parent=1 // pred_fallthru
      _
    %p21 = scmp.lt.s32.totalorder 0, 0
    // Predicated region
    $region10: #{tpu_custom_call.1} parent=1 // pred_check
      %p22 = pneg %p21
    $region11: #{tpu_custom_call.1} parent=1 // pred_check_branch
      %24 = sbr.rel (%p22) target = $region13
    $region12: #{tpu_custom_call.1} parent=1 // pred_region
      %v25 = vld [vmem:[#allocation2] sm:$0xff]
      %v26 = vld [vmem:[#allocation2 + $0x8] sm:$0xff]
      %27 = vrot.lane.b32.xlu0 %v25, 127
      %v28 = vpop.permute.xlu0 %27
      %29 = vrot.lane.b32.xlu0 %v26, 127
      %v30 = vpop.permute.xlu0 %29
      %v31 = vlaneseq
      %v32 = vand.u32 %v31, 127
      %vm33 = vcmp.lt.s32.totalorder %v32, 127
      %v34 = vsel %vm33, %v28, %v30
      %v35 = vsel %vm33, %v30, %v28
      %vm36 = vcmp.lt.f32.partialorder %v34, %v25
      %vm37 = vcmp.lt.f32.partialorder %v35, %v26
      %v38 = vsel %vm36, 1, 0
      %v39 = vsel %vm37, 1, 0
      %v40 = vcvt.s32.f32 %v38
      %v41 = vcvt.s32.f32 %v39
      %v42 = vrot.slane %v40, 4
      %v43 = vadd.f32 %v40, %v42
      %v44 = vrot.slane %v43, 2
      %v45 = vadd.f32 %v43, %v44
      %v46 = vrot.slane %v45, 1
      %v47 = vadd.f32 %v45, %v46
      %v48 = vrot.slane %v41, 4
      %v49 = vadd.f32 %v41, %v48
      %v50 = vrot.slane %v49, 2
      %v51 = vadd.f32 %v49, %v50
      %v52 = vrot.slane %v51, 1
      %v53 = vadd.f32 %v51, %v52
      %v54 = vadd.f32 %v47, 0.0
      %v55 = vadd.f32 %v53, 0.0
      %v58 = vcombine.low %v54, %v55
      %v60 = vunpack.c.l.s4 1966171168
      %v61 = vunpack.c.0.s8 %v60
      %v62 = vlaneseq
      %v63 = vshrl.u32 %v62, 7
      %v64 = vsub.s32 %v61, %v63
      %v65 = vrot.slane %v58, %v64
      %v67 = vunpack.c.l.s4 1966171168
      %v68 = vunpack.c.0.s8 %v67
      %v69 = vlaneseq
      %v70 = vshrl.u32 %v69, 7
      %v71 = vsub.s32 %v68, %v70
      %v72 = vrot.slane %v65, %v71
      %v74 = vlaneseq
      %vm75 = vcmp.ge.s32.totalorder %v74, 0
      %vm76 = vcmp.lt.s32.totalorder %v74, 256
      %vm77 = vmand %vm75, %vm76
      %78 = vst.msk [vmem:[#allocation5] sm:$0x3] %vm77, %v72
    $region13: #{tpu_custom_call.1} parent=1 // pred_fallthru
      _
    %p79 = scmp.eq.s32.totalorder 0, 0
    // Predicated region
    $region14: #{tpu_custom_call.1} parent=1 // pred_check
      %p80 = pneg %p79
    $region15: #{tpu_custom_call.1} parent=1 // pred_check_branch
      %82 = sbr.rel (%p80) target = $region17
    $region16: #{tpu_custom_call.1} parent=1 // pred_region
      %v83 = vld [vmem:[#allocation2] sm:$0xff]
      %v84 = vld [vmem:[#allocation2 + $0x8] sm:$0xff]
      %85 = vrot.lane.b32.xlu0 %v83, 127
      %v86 = vpop.permute.xlu0 %85
      %87 = vrot.lane.b32.xlu0 %v84, 127
      %v88 = vpop.permute.xlu0 %87
      %v89 = vlaneseq
      %v90 = vand.u32 %v89, 127
      %vm91 = vcmp.lt.s32.totalorder %v90, 127
      %v92 = vsel %vm91, %v86, %v88
      %v93 = vsel %vm91, %v88, %v86
      %vm94 = vcmp.lt.f32.partialorder %v92, %v83
      %vm95 = vcmp.lt.f32.partialorder %v93, %v84
      %v96 = vsel %vm94, 1, 0
      %v97 = vsel %vm95, 1, 0
      %v98 = vcvt.s32.f32 %v96
      %v99 = vcvt.s32.f32 %v97
      %v100 = vlaneseq
      %v101 = vshrl.u32 %v100, 7
      %vm102 = vcmp.lt.s32.totalorder %v101, 6
      %v103 = vsel %vm102, %v98, 0.0
      %v104 = vsel %vm102, %v99, 0.0
      %v105 = vrot.slane %v103, 4
      %v106 = vadd.f32 %v103, %v105
      %v107 = vrot.slane %v106, 2
      %v108 = vadd.f32 %v106, %v107
      %v109 = vrot.slane %v108, 1
      %v110 = vadd.f32 %v108, %v109
      %v111 = vrot.slane %v104, 4
      %v112 = vadd.f32 %v104, %v111
      %v113 = vrot.slane %v112, 2
      %v114 = vadd.f32 %v112, %v113
      %v115 = vrot.slane %v114, 1
      %v116 = vadd.f32 %v114, %v115
      %v117 = vadd.f32 %v110, 0.0
      %v118 = vadd.f32 %v116, 0.0
      %v121 = vcombine.low %v117, %v118
      %v123 = vunpack.c.l.s4 1966171168
      %v124 = vunpack.c.0.s8 %v123
      %v125 = vlaneseq
      %v126 = vshrl.u32 %v125, 7
      %v127 = vsub.s32 %v124, %v126
      %v128 = vrot.slane %v121, %v127
      %v130 = vunpack.c.l.s4 1966171168
      %v131 = vunpack.c.0.s8 %v130
      %v132 = vlaneseq
      %v133 = vshrl.u32 %v132, 7
      %v134 = vsub.s32 %v131, %v133
      %v135 = vrot.slane %v128, %v134
      %v137 = vlaneseq
      %vm138 = vcmp.ge.s32.totalorder %v137, 0
      %vm139 = vcmp.lt.s32.totalorder %v137, 256
      %vm140 = vmand %vm138, %vm139
      %141 = vst.msk [vmem:[#allocation5] sm:$0x3] %vm140, %v135
    $region17: #{tpu_custom_call.1} parent=1 // pred_fallthru
      _
    // Predicated region
    $region18: #{tpu_custom_call.1} parent=1 // pred_check
      _
    $region19: #{tpu_custom_call.1} parent=1 // pred_check_branch
      %143 = sbr.rel (0) target = $region21
    $region20: #{tpu_custom_call.1} parent=1 // pred_region
      %s145 = ssub.s32 32, 32
      %146 = vsyncadd [#allocation4], %s145
      %s148 = sshll.u32 [#allocation5], 4
      %s149 = int_to_ptr.vmem [resolvable:$true] %s148
      %151 = dma.vmem_to_hbm [thread:$0]  %s149, 32, %s1, [#allocation4]
    $region21: #{tpu_custom_call.1} parent=1 // pred_fallthru
      _
    // Predicated region
    $region22: #{tpu_custom_call.1} parent=1 // pred_check
      _
    $region23: #{tpu_custom_call.1} parent=1 // pred_check_branch
      %153 = sbr.rel (0) target = $region25
    $region24: #{tpu_custom_call.1} parent=1 // pred_region
      %154 = dma.done [#allocation4], 32
    $region25: #{tpu_custom_call.1} parent=1 // pred_fallthru
      _
    %155 = vsyncpa [#allocation3], 1
    %156 = vsyncpa [#allocation4], 1

</llo_original>
